<compile_context>
chip_gen: v7x
topology: tpu7x:2x2x1
jax: 0.10.0
libtpu: 0.0.40
codegen_flags: <defaults>
</compile_context>

<pallas_src>
import jax
import jax.numpy as jnp
from jax.experimental import pallas as pl
from jax.experimental.pallas import tpu as pltpu


def _min_kernel(x_ref, y_ref, z_ref, w_ref, xo_ref, yo_ref, zo_ref, wo_ref):
    # x_ref:  (B, C, N)   raw layout, min over C (axis 1)
    # y_ref:  (1, YN)     y flattened, global min
    # z_ref:  (B, CHW)    flattened, lane-dense
    # w_ref:  (B, CHW)    flattened, lane-dense (HBM buffer aliased with wo_ref)
    # xo_ref: (B, N)      min(x, dim=1)
    # yo_ref: (1, 1)      global min(y)
    # zo_ref: (1, CHW)    min(z, dim=0, keepdim)
    # wo_ref: (B, CHW)    minimum(z, w)
    z_flat = z_ref[...]                                            # load z once, reuse twice
    wo_ref[...] = jnp.minimum(z_flat, w_ref[...])                   # elementwise min(z, w)
    zo_ref[...] = jnp.min(z_flat, axis=0, keepdims=True)            # min over batch, one full store

    B = x_ref.shape[0]                                             # static Python int (tiny)
    for b in range(B):                                             # unrolled: per-batch sublane reduce
        xo_ref[pl.ds(b, 1), :] = jnp.min(x_ref[b], axis=0, keepdims=True)

    yo_ref[...] = jnp.min(y_ref[...], axis=1, keepdims=True)        # (1, 1) global min of y


def _torch_min_impl(x, y, z, w):
    B, C, N = x.shape
    Bz, Cz, Hz, Wz = z.shape
    CHW = Cz * Hz * Wz
    assert x.dtype == y.dtype == z.dtype == w.dtype, "kernel assumes a single dtype"
    assert w.shape == z.shape

    # Contiguous (row-major) reshapes only -> free XLA bitcasts, no copies.
    y2 = y.reshape(1, -1)
    z2 = z.reshape(Bz, CHW)
    w2 = w.reshape(Bz, CHW)

    vmem = pl.BlockSpec(memory_space=pltpu.MemorySpace.VMEM)
    xo, yo2, zo2, wo2 = pl.pallas_call(
        _min_kernel,
        out_shape=(
            jax.ShapeDtypeStruct((B, N), x.dtype),        # min(x, dim=1)
            jax.ShapeDtypeStruct((1, 1), y.dtype),        # min(y)
            jax.ShapeDtypeStruct((1, CHW), z.dtype),      # min(z, dim=0, keepdim)
            jax.ShapeDtypeStruct((Bz, CHW), w.dtype),     # minimum(z, w)
        ),
        in_specs=[vmem, vmem, vmem, vmem],
        out_specs=(vmem, vmem, vmem, vmem),
        input_output_aliases={3: 3},                      # w2's HBM buffer reused for minimum(z, w)
    )(x, y2, z2, w2)

    return (
        xo,                                               # (B, N)
        yo2[0, 0],                                        # 0-dim scalar, like torch.min(y)
        zo2.reshape(1, Cz, Hz, Wz),                       # contiguous reshape (bitcast)
        wo2.reshape(Bz, Cz, Hz, Wz),                      # contiguous reshape (bitcast)
    )


# w is donated so input_output_aliases={3: 3} actually reuses its buffer (no copy).
torch_min_model = jax.jit(_torch_min_impl, donate_argnums=(3,))


if __name__ == "__main__":
    key = jax.random.PRNGKey(0)
    kx, ky, kz, kw = jax.random.split(key, 4)

    # Small shapes consistent with the forward pass.
    x = jax.random.normal(kx, (2, 4, 16), dtype=jnp.float32)
    y = jax.random.normal(ky, (4, 8, 16), dtype=jnp.float32)
    z = jax.random.normal(kz, (2, 4, 8, 16), dtype=jnp.float32)
    w = jax.random.normal(kw, (2, 4, 8, 16), dtype=jnp.float32)

    # References computed BEFORE the kernel call because w is donated at the jit boundary.
    ref_x = jnp.min(x, axis=1)
    ref_y = jnp.min(y)
    ref_z = jnp.min(z, axis=0, keepdims=True)
    ref_w = jnp.minimum(z, w)

    xo, yo, zo, wo = jax.block_until_ready(torch_min_model(x, y, z, w))

    assert xo.shape == (2, 16) and jnp.allclose(xo, ref_x)
    assert yo.shape == () and jnp.allclose(yo, ref_y)
    assert zo.shape == (1, 4, 8, 16) and jnp.allclose(zo, ref_z)
    assert wo.shape == (2, 4, 8, 16) and jnp.allclose(wo, ref_w)

    print("KERNEL_OK")
</pallas_src>

<mosaic_0001>
module attributes {stable_mosaic.version = 11 : i64} {
  func.func @_min_kernel(%arg0: memref<2x4x16xf32, #tpu.memory_space<vmem>>, %arg1: memref<1x512xf32, #tpu.memory_space<vmem>>, %arg2: memref<2x512xf32, #tpu.memory_space<vmem>>, %arg3: memref<2x512xf32, #tpu.memory_space<vmem>>, %arg4: memref<2x16xf32, #tpu.memory_space<vmem>>, %arg5: memref<1x1xf32, #tpu.memory_space<vmem>>, %arg6: memref<1x512xf32, #tpu.memory_space<vmem>>, %arg7: memref<2x512xf32, #tpu.memory_space<vmem>>) attributes {dimension_semantics = [], scalar_prefetch = 0 : i64, scratch_operands = 0 : i64, tpu.core_type = #tpu.core_type<tc>} {
    %c0 = arith.constant 0 : index
    %c0_0 = arith.constant 0 : index
    %0 = vector.load %arg2[%c0, %c0_0] : memref<2x512xf32, #tpu.memory_space<vmem>>, vector<2x512xf32>
    %c0_1 = arith.constant 0 : index
    %c0_2 = arith.constant 0 : index
    %1 = vector.load %arg3[%c0_1, %c0_2] : memref<2x512xf32, #tpu.memory_space<vmem>>, vector<2x512xf32>
    %2 = arith.minimumf %0, %1 : vector<2x512xf32>
    %c0_3 = arith.constant 0 : index
    %c0_4 = arith.constant 0 : index
    %3 = vector.load %arg7[%c0_3, %c0_4] : memref<2x512xf32, #tpu.memory_space<vmem>>, vector<2x512xf32>
    tpu.vector_store %arg7[%c0_3, %c0_4], %2 {strides = array<i32>} : memref<2x512xf32, #tpu.memory_space<vmem>>, vector<2x512xf32>,
    %cst = arith.constant dense<0x7F800000> : vector<512xf32>
    %4 = vector.multi_reduction <minimumf>, %0, %cst [0] : vector<2x512xf32> to vector<512xf32>
    %5 = vector.shape_cast %4 : vector<512xf32> to vector<1x512xf32>
    %c0_5 = arith.constant 0 : index
    %c0_6 = arith.constant 0 : index
    %6 = vector.load %arg6[%c0_5, %c0_6] : memref<1x512xf32, #tpu.memory_space<vmem>>, vector<1x512xf32>
    tpu.vector_store %arg6[%c0_5, %c0_6], %5 {strides = array<i32>} : memref<1x512xf32, #tpu.memory_space<vmem>>, vector<1x512xf32>,
    %c0_7 = arith.constant 0 : index
    %c0_8 = arith.constant 0 : index
    %c0_9 = arith.constant 0 : index
    %7 = vector.load %arg0[%c0_7, %c0_8, %c0_9] : memref<2x4x16xf32, #tpu.memory_space<vmem>>, vector<1x4x16xf32>
    %8 = vector.shape_cast %7 : vector<1x4x16xf32> to vector<4x16xf32>
    %cst_10 = arith.constant dense<0x7F800000> : vector<16xf32>
    %9 = vector.multi_reduction <minimumf>, %8, %cst_10 [0] : vector<4x16xf32> to vector<16xf32>
    %10 = vector.shape_cast %9 : vector<16xf32> to vector<1x16xf32>
    %c0_11 = arith.constant 0 : index
    %c0_12 = arith.constant 0 : index
    %11 = vector.load %arg4[%c0_11, %c0_12] : memref<2x16xf32, #tpu.memory_space<vmem>>, vector<1x16xf32>
    tpu.vector_store %arg4[%c0_11, %c0_12], %10 {strides = array<i32>} : memref<2x16xf32, #tpu.memory_space<vmem>>, vector<1x16xf32>,
    %c1 = arith.constant 1 : index
    %c0_13 = arith.constant 0 : index
    %c0_14 = arith.constant 0 : index
    %12 = vector.load %arg0[%c1, %c0_13, %c0_14] : memref<2x4x16xf32, #tpu.memory_space<vmem>>, vector<1x4x16xf32>
    %13 = vector.shape_cast %12 : vector<1x4x16xf32> to vector<4x16xf32>
    %cst_15 = arith.constant dense<0x7F800000> : vector<16xf32>
    %14 = vector.multi_reduction <minimumf>, %13, %cst_15 [0] : vector<4x16xf32> to vector<16xf32>
    %15 = vector.shape_cast %14 : vector<16xf32> to vector<1x16xf32>
    %c1_16 = arith.constant 1 : index
    %c0_17 = arith.constant 0 : index
    %16 = vector.load %arg4[%c1_16, %c0_17] : memref<2x16xf32, #tpu.memory_space<vmem>>, vector<1x16xf32>
    tpu.vector_store %arg4[%c1_16, %c0_17], %15 {strides = array<i32>} : memref<2x16xf32, #tpu.memory_space<vmem>>, vector<1x16xf32>,
    %c0_18 = arith.constant 0 : index
    %c0_19 = arith.constant 0 : index
    %17 = vector.load %arg1[%c0_18, %c0_19] : memref<1x512xf32, #tpu.memory_space<vmem>>, vector<1x512xf32>
    %cst_20 = arith.constant dense<0x7F800000> : vector<1xf32>
    %18 = vector.multi_reduction <minimumf>, %17, %cst_20 [1] : vector<1x512xf32> to vector<1xf32>
    %19 = vector.shape_cast %18 : vector<1xf32> to vector<1x1xf32>
    %c0_21 = arith.constant 0 : index
    %c0_22 = arith.constant 0 : index
    %20 = vector.load %arg5[%c0_21, %c0_22] : memref<1x1xf32, #tpu.memory_space<vmem>>, vector<1x1xf32>
    tpu.vector_store %arg5[%c0_21, %c0_22], %19 {strides = array<i32>} : memref<1x1xf32, #tpu.memory_space<vmem>>, vector<1x1xf32>,
    return
  }
}

</mosaic_0001>

<llo_original>
// kernel: _torch_min_impl.1
$region0: #{_torch_min_impl.1}
  #allocation0 [shape = 'u32[]', space=smem, size = 0x4, offset = 0x4, fixed_abs, tag = 'smem constant byte address 0x4 - core index']
  #allocation1 [shape = 'u32[144,128]{1,0:T(1,128)}', space=vmem, size = 0x12000, scoped, tag = 'internal scratch']
  %s0 = inlined_call_operand.vmem [shape: f32[2,4,16], index: 0, kind: input, shape index: {}]
  %s1 = inlined_call_operand.vmem [shape: f32[1,512], index: 1, kind: input, shape index: {}]
  %s2 = inlined_call_operand.vmem [shape: f32[2,512], index: 2, kind: input, shape index: {}]
  %s3 = inlined_call_operand.vmem [shape: f32[2,512], index: 3, kind: input, shape index: {}, may-alias: {3,7}]
  %s4 = inlined_call_operand.hbm [shape: f32[2,16], index: 4, kind: output, shape index: {0}]
  %s5 = inlined_call_operand.hbm [shape: f32[1,1], index: 5, kind: output, shape index: {1}]
  %s6 = inlined_call_operand.vmem [shape: f32[1,512], index: 6, kind: output, shape index: {2}]
  %s7 = inlined_call_operand.vmem [shape: f32[2,512], index: 7, kind: output, shape index: {3}, may-alias: {3,7}]
  %8 = xla_tuple %s4, %s5, %s6, %s7
  %s9 = sld [smem:[#allocation0]]
  $region50: #{_torch_min_impl.1} parent=0
    _
  %s11 = ssub.s32 1, %s9
  %s12 = scalar_select 0, %s11, %s9
  $region1: #{_torch_min_impl.1} parent=0
    #allocation2 [shape = 'u8[1024]{0}', space=vmem, size = 0x400, scoped, tag = 'output window, operand 0, single buffered']
    #allocation3 [shape = 's32[1]{0}', space=sflag, size = 0x4, scoped, tag = 'scoped memory for _torch_min_impl.1']
    #allocation4 [shape = 'u8[512]{0}', space=vmem, size = 0x400, scoped, tag = 'output window, operand 1, single buffered']
    #allocation5 [shape = 's32[1]{0}', space=sflag, size = 0x4, scoped, tag = 'scoped memory for _torch_min_impl.1']
    %13 = vsyncpa [#allocation3], 0
    %14 = vsyncpa [#allocation5], 0
    // Predicated region
    $region2: #{_torch_min_impl.1} parent=1 // pred_check
      _
    $region3: #{_torch_min_impl.1} parent=1 // pred_check_branch
      %16 = sbr.rel (0) target = $region5
    $region4: #{_torch_min_impl.1} parent=1 // pred_region
      _
    $region5: #{_torch_min_impl.1} parent=1 // pred_fallthru
      _
    // Predicated region
    $region6: #{_torch_min_impl.1} parent=1 // pred_check
      _
    $region7: #{_torch_min_impl.1} parent=1 // pred_check_branch
      %18 = sbr.rel (0) target = $region9
    $region8: #{_torch_min_impl.1} parent=1 // pred_region
      _
    $region9: #{_torch_min_impl.1} parent=1 // pred_fallthru
      _
    // Predicated region
    $region10: #{_torch_min_impl.1} parent=1 // pred_check
      _
    $region11: #{_torch_min_impl.1} parent=1 // pred_check_branch
      %20 = sbr.rel (0) target = $region13
    $region12: #{_torch_min_impl.1} parent=1 // pred_region
      _
    $region13: #{_torch_min_impl.1} parent=1 // pred_fallthru
      _
    // Predicated region
    $region14: #{_torch_min_impl.1} parent=1 // pred_check
      _
    $region15: #{_torch_min_impl.1} parent=1 // pred_check_branch
      %22 = sbr.rel (0) target = $region17
    $region16: #{_torch_min_impl.1} parent=1 // pred_region
      _
    $region17: #{_torch_min_impl.1} parent=1 // pred_fallthru
      _
    %v23 = vld [vmem:[%s2] sm:$0xff]
    %v24 = vld [vmem:[%s3] sm:$0xff]
    %v25 = vmin.f32 %v23, %v24
    %26 = vst [vmem:[%s7] sm:$0xff] %v25
    %v28 = vcombine.high %v23, %v23
    %v30 = vunpack.c.l.s4 1983009808
    %v31 = vunpack.c.0.s8 %v30
    %v32 = vlaneseq
    %v33 = vshrl.u32 %v32, 7
    %v34 = vsub.s32 %v31, %v33
    %v35 = vrot.slane %v23, %v34
    %v37 = vunpack.c.l.s4 1983009808
    %v38 = vunpack.c.0.s8 %v37
    %v39 = vlaneseq
    %v40 = vshrl.u32 %v39, 7
    %v41 = vsub.s32 %v38, %v40
    %v42 = vrot.slane %v28, %v41
    %v43 = vcombine.high %v35, %v35
    %v44 = vcombine.high %v42, %v42
    %vm49 = vcmask 1041408
    %v50 = vsel %vm49, %v35, inf
    %v51 = vrot.slane %v50, 4
    %v52 = vmin.f32 %v50, %v51
    %v53 = vrot.slane %v52, 2
    %v54 = vmin.f32 %v52, %v53
    %v55 = vrot.slane %v54, 1
    %v56 = vmin.f32 %v54, %v55
    %v57 = vsel %vm49, %v43, inf
    %v58 = vrot.slane %v57, 4
    %v59 = vmin.f32 %v57, %v58
    %v60 = vrot.slane %v59, 2
    %v61 = vmin.f32 %v59, %v60
    %v62 = vrot.slane %v61, 1
    %v63 = vmin.f32 %v61, %v62
    %v64 = vsel %vm49, %v42, inf
    %v65 = vrot.slane %v64, 4
    %v66 = vmin.f32 %v64, %v65
    %v67 = vrot.slane %v66, 2
    %v68 = vmin.f32 %v66, %v67
    %v69 = vrot.slane %v68, 1
    %v70 = vmin.f32 %v68, %v69
    %v71 = vsel %vm49, %v44, inf
    %v72 = vrot.slane %v71, 4
    %v73 = vmin.f32 %v71, %v72
    %v74 = vrot.slane %v73, 2
    %v75 = vmin.f32 %v73, %v74
    %v76 = vrot.slane %v75, 1
    %v77 = vmin.f32 %v75, %v76
    %v82 = vcombine.low %v56, %v63
    %v83 = vcombine.low %v70, %v77
    %v85 = vunpack.c.l.s4 1966171168
    %v86 = vunpack.c.0.s8 %v85
    %v87 = vlaneseq
    %v88 = vshrl.u32 %v87, 7
    %v89 = vsub.s32 %v86, %v88
    %v90 = vrot.slane %v82, %v89
    %v92 = vunpack.c.l.s4 1966171168
    %v93 = vunpack.c.0.s8 %v92
    %v94 = vlaneseq
    %v95 = vshrl.u32 %v94, 7
    %v96 = vsub.s32 %v93, %v95
    %v97 = vrot.slane %v83, %v96
    %v98 = vcombine.low %v90, %v97
    %v100 = vunpack.c.l.s4 1966171168
    %v101 = vunpack.c.0.s8 %v100
    %v102 = vlaneseq
    %v103 = vshrl.u32 %v102, 7
    %v104 = vsub.s32 %v101, %v103
    %v105 = vrot.slane %v98, %v104
    %v107 = vlaneseq
    %vm108 = vcmp.ge.s32.totalorder %v107, 0
    %vm109 = vcmp.lt.s32.totalorder %v107, 512
    %vm110 = vmand %vm108, %vm109
    %111 = vst.msk [vmem:[%s6] sm:$0xf] %vm110, %v105
    %v112 = vld [vmem:[%s0] sm:$0xf]
    %vm113 = vcmask 125952
    %v114 = vsel %vm113, %v112, inf
    %v115 = vrot.slane %v114, 4
    %v116 = vmin.f32 %v114, %v115
    %v117 = vrot.slane %v116, 2
    %v118 = vmin.f32 %v116, %v117
    %v119 = vrot.slane %v118, 1
    %v120 = vmin.f32 %v118, %v119
    %vm121 = vcmask 122880
    %122 = vst.msk [vmem:[#allocation2] sm:$0x1] %vm121, %v120
    %s123 = scalar_lea.vmem %s0, 4
    %v124 = vld [vmem:[%s123] sm:$0xf]
    %v125 = vsel %vm113, %v124, inf
    %v126 = vrot.slane %v125, 4
    %v127 = vmin.f32 %v125, %v126
    %v128 = vrot.slane %v127, 2
    %v129 = vmin.f32 %v127, %v128
    %v130 = vrot.slane %v129, 1
    %v131 = vmin.f32 %v129, %v130
    %132 = vst.msk [vmem:[#allocation2 + $0x1] sm:$0x1] %vm121, %v131
    %v133 = vld [vmem:[%s1] sm:$0xf]
    %v135 = vlaneseq
    %v136 = vshrl.u32 %v135, 7
    %v137 = vsub.s32 0, %v136
    %v138 = vrot.slane %v133, %v137
    %v139 = vlaneseq
    %v140 = vshrl.u32 %v139, 7
    %v141 = vsub.s32 1, %v140
    %v142 = vrot.slane %v133, %v141
    %v143 = vlaneseq
    %v144 = vshrl.u32 %v143, 7
    %v145 = vsub.s32 2, %v144
    %v146 = vrot.slane %v133, %v145
    %v147 = vlaneseq
    %v148 = vshrl.u32 %v147, 7
    %v149 = vsub.s32 3, %v148
    %v150 = vrot.slane %v133, %v149
    %vm155 = vcmask 1040384
    %v156 = vsel %vm155, %v138, inf
    %v157 = vsel %vm155, %v142, inf
    %v158 = vsel %vm155, %v146, inf
    %v159 = vsel %vm155, %v150, inf
    %v160 = vmin.f32 %v156, %v157
    %v161 = vmin.f32 %v158, %v159
    %v162 = vmin.f32 %v160, %v161
    %163 = vmin.xlane.f32.xlu0 %v162
    %v164 = vpop.xlane.xlu0 %163
    %vm165 = vcmask 0
    %166 = vst.msk [vmem:[#allocation4] sm:$0x1] %vm165, %v164
    // Predicated region
    $region18: #{_torch_min_impl.1} parent=1 // pred_check
      _
    $region19: #{_torch_min_impl.1} parent=1 // pred_check_branch
      %168 = sbr.rel (0) target = $region21
    $region20: #{_torch_min_impl.1} parent=1 // pred_region
      %s170 = ssub.s32 32, 32
      %171 = vsyncadd [#allocation3], %s170
      %s173 = sshll.u32 [#allocation2], 4
      %s174 = int_to_ptr.vmem [resolvable:$true] %s173
      %176 = dma.vmem_to_hbm [thread:$0]  %s174, 32, %s4, [#allocation3]
    $region21: #{_torch_min_impl.1} parent=1 // pred_fallthru
      _
    // Predicated region
    $region22: #{_torch_min_impl.1} parent=1 // pred_check
      _
    $region23: #{_torch_min_impl.1} parent=1 // pred_check_branch
      %178 = sbr.rel (0) target = $region25
    $region24: #{_torch_min_impl.1} parent=1 // pred_region
      %s180 = ssub.s32 16, 16
      %181 = vsyncadd [#allocation5], %s180
      %s183 = sshll.u32 [#allocation4], 4
      %s184 = int_to_ptr.vmem [resolvable:$true] %s183
      %186 = dma.vmem_to_hbm [thread:$0]  %s184, 16, %s5, [#allocation5]
    $region25: #{_torch_min_impl.1} parent=1 // pred_fallthru
      _
    // Predicated region
    $region26: #{_torch_min_impl.1} parent=1 // pred_check
      _
    $region27: #{_torch_min_impl.1} parent=1 // pred_check_branch
      %188 = sbr.rel (0) target = $region29
    $region28: #{_torch_min_impl.1} parent=1 // pred_region
      _
    $region29: #{_torch_min_impl.1} parent=1 // pred_fallthru
      _
    // Predicated region
    $region30: #{_torch_min_impl.1} parent=1 // pred_check
      _
    $region31: #{_torch_min_impl.1} parent=1 // pred_check_branch
      %190 = sbr.rel (0) target = $region33
    $region32: #{_torch_min_impl.1} parent=1 // pred_region
      _
    $region33: #{_torch_min_impl.1} parent=1 // pred_fallthru
      _
    // Predicated region
    $region34: #{_torch_min_impl.1} parent=1 // pred_check
      _
    $region35: #{_torch_min_impl.1} parent=1 // pred_check_branch
      %192 = sbr.rel (0) target = $region37
    $region36: #{_torch_min_impl.1} parent=1 // pred_region
      %193 = dma.done [#allocation3], 32
    $region37: #{_torch_min_impl.1} parent=1 // pred_fallthru
      _
    // Predicated region
    $region38: #{_torch_min_impl.1} parent=1 // pred_check
      _
    $region39: #{_torch_min_impl.1} parent=1 // pred_check_branch
      %195 = sbr.rel (0) target = $region41
    $region40: #{_torch_min_impl.1} parent=1 // pred_region
      %196 = dma.done [#allocation5], 16
    $region41: #{_torch_min_impl.1} parent=1 // pred_fallthru
      _
    // Predicated region
    $region42: #{_torch_min_impl.1} parent=1 // pred_check
      _
    $region43: #{_torch_min_impl.1} parent=1 // pred_check_branch
      %198 = sbr.rel (0) target = $region45
    $region44: #{_torch_min_impl.1} parent=1 // pred_region
      _
    $region45: #{_torch_min_impl.1} parent=1 // pred_fallthru
      _
    // Predicated region
    $region46: #{_torch_min_impl.1} parent=1 // pred_check
      _
    $region47: #{_torch_min_impl.1} parent=1 // pred_check_branch
      %200 = sbr.rel (0) target = $region49
    $region48: #{_torch_min_impl.1} parent=1 // pred_region
      _
    $region49: #{_torch_min_impl.1} parent=1 // pred_fallthru
      _
    %201 = vsyncpa [#allocation3], 1
    %202 = vsyncpa [#allocation5], 1

</llo_original>
